<compile_context>
chip_gen: v7x
topology: tpu7x:2x2x1
jax: 0.10.0
libtpu: 0.0.40
codegen_flags: <defaults>
</compile_context>

<pallas_src>
import math
import functools

import jax
import jax.numpy as jnp
from jax.experimental import pallas as pl
from jax.experimental.pallas import tpu as pltpu


def _round_up(x, m):
    return (x + m - 1) // m * m


# ----------------------------- conv kernel ----------------------------------

def _conv_kernel(w_ref, b_ref, ph_ref, o_ref, *, taps, mext):
    """grid = (B, k_tiles); k (Cin chunks) is the resident reduction axis.

    w_ref : (1, 9, Cout_p, tCin)  bf16  weight chunk for this k step
    b_ref : (Cout_p, 1)           f32   bias
    ph_ref: (1, 4, tCin, L1p)     bf16  flattened space-to-depth phases (one batch)
    o_ref : (1, Cout_p, Mext_p)   f32   output block (resident across k)
    """
    @pl.when(pl.program_id(1) == 0)
    def _():
        # Initialize the resident output block with the broadcast bias.
        o_ref[0] = jnp.broadcast_to(b_ref[...], o_ref.shape[1:])

    # Nine taps, statically unrolled.  Each tap is a constant lane offset into
    # the flattened phase image, so the im2col tile never touches HBM.
    for t, p, off in taps:
        o_ref[0] += jnp.dot(
            w_ref[0, t],                           # (Cout_p, tCin)  bf16
            ph_ref[0, p, :, pl.ds(off, mext)],     # (tCin, Mext_p)  bf16
            preferred_element_type=jnp.float32)


def _plan_cin_tile(cin, cout_p, l1p, mext_p, budget=20 * 1024 * 1024):
    """Pick the Cin chunk so double-buffered blocks fit the VMEM budget."""
    def est(tc):
        return (2 * 4 * tc * l1p * 2          # phase block (double-buffered)
                + 2 * cout_p * mext_p * 4     # output block
                + 2 * 9 * cout_p * tc * 2)    # weight block

    if est(cin) <= budget:
        return cin
    fitting = [tc for tc in range(8, cin, 8)
               if cin % tc == 0 and est(tc) <= budget]
    if fitting:
        return max(fitting)
    # TODO(synk): also tile the flattened pixel axis for extremely large
    # activations; for now fall back to the smallest Cin chunk we can.
    return 8 if cin % 8 == 0 else cin


@jax.jit
def downsample_with_conv(x, w, b):
    """x:(B,Cin,H,W)  w:(Cout,Cin,3,3)  b:(Cout,)  ->  (B,Cout,Ho,Wo).

    Matches: F.pad(x, (0,1,0,1)); Conv2d(k=3, stride=2, padding=0).
    """
    B, Cin, H, W = x.shape
    Cout = w.shape[0]
    Ho = (H - 2) // 2 + 1
    Wo = (W - 2) // 2 + 1

    Cout_p = _round_up(Cout, 16)               # bf16 sublane packing
    Mext = Ho * (Wo + 1)                       # extended canvas (1 junk col/row)
    Mext_p = _round_up(Mext, 128)              # lane-dense output stores
    L1 = (Ho + 1) * (Wo + 1)
    L1p = _round_up(Mext_p + Wo + 2, 128)      # room for the largest tap shift

    # --- one XLA pass: pad + cast to bf16 + space-to-depth phase relayout ---
    xb = x.astype(jnp.bfloat16)
    xp = jnp.pad(xb, ((0, 0), (0, 0),
                      (0, 2 * (Ho + 1) - H), (0, 2 * (Wo + 1) - W)))
    ph = xp.reshape(B, Cin, Ho + 1, 2, Wo + 1, 2).transpose(0, 3, 5, 1, 2, 4)
    ph = ph.reshape(B, 4, Cin, L1)             # phase p = (row parity)*2 + col parity
    ph = jnp.pad(ph, ((0, 0), (0, 0), (0, 0), (0, L1p - L1)))

    # --- weights (k_tiles, 9, Cout_p, tCin) bf16; bias (Cout_p, 1) f32 -------
    tCin = _plan_cin_tile(Cin, Cout_p, L1p, Mext_p)
    k_tiles = Cin // tCin
    w9 = jnp.transpose(w, (2, 3, 0, 1)).reshape(9, Cout, Cin)   # tap-major
    if Cout_p != Cout:
        w9 = jnp.pad(w9, ((0, 0), (0, Cout_p - Cout), (0, 0)))
    wt = (w9.reshape(9, Cout_p, k_tiles, tCin)
             .transpose(2, 0, 1, 3).astype(jnp.bfloat16))
    bp = jnp.pad(b.astype(jnp.float32).reshape(Cout, 1),
                 ((0, Cout_p - Cout), (0, 0)))

    # Static tap table: (tap id, phase index, flat lane offset).
    taps = tuple((di * 3 + dj,
                  (di % 2) * 2 + (dj % 2),
                  (di // 2) * (Wo + 1) + (dj // 2))
                 for di in range(3) for dj in range(3))

    kernel = functools.partial(_conv_kernel, taps=taps, mext=Mext_p)

    y = pl.pallas_call(
        kernel,
        out_shape=jax.ShapeDtypeStruct((B, Cout_p, Mext_p), jnp.float32),
        grid_spec=pltpu.PrefetchScalarGridSpec(
            num_scalar_prefetch=0,
            grid=(B, k_tiles),
            in_specs=[
                pl.BlockSpec((1, 9, Cout_p, tCin),
                             lambda bi, k: (k, 0, 0, 0)),      # weights
                pl.BlockSpec((Cout_p, 1), lambda bi, k: (0, 0)),  # bias
                pl.BlockSpec((1, 4, tCin, L1p),
                             lambda bi, k: (bi, 0, k, 0)),     # phases
            ],
            out_specs=pl.BlockSpec((1, Cout_p, Mext_p),
                                   lambda bi, k: (bi, 0, 0)),
        ),
        compiler_params=pltpu.CompilerParams(
            dimension_semantics=("parallel", "arbitrary"),
            vmem_limit_bytes=32 * 1024 * 1024),
    )(wt, bp, ph)

    # Drop padded Cout rows and the one garbage column per output row.
    y = y[:, :Cout, :Mext].reshape(B, Cout, Ho, Wo + 1)[:, :, :, :Wo]
    return y


# ----------------------------- avg-pool kernel ------------------------------

def _avgpool_kernel(x_ref, o_ref, *, width):
    """2x2/stride-2 average pool; input rows are pre-merged in pairs.

    x_ref: (tn, th, 2W) — lanes [0,W) = even row, [W,2W) = odd row of the pair.
    o_ref: (tn, th, W)  — valid means live at even lanes (compacted in XLA).
    """
    xv = x_ref[...]
    # a[..., k] = x[k] + x[(k +/- W) mod 2W]  (half-roll: direction-agnostic)
    a = xv + pltpu.roll(xv, width, 2)
    # valid output column j sits at lane 2j:  a[2j] + a[2j+1]
    o_ref[...] = 0.25 * (a[:, :, :width] + a[:, :, 1:width + 1])


@jax.jit
def downsample_avgpool(x):
    """avg_pool2d(x, kernel=2, stride=2), floor semantics (matches torch)."""
    B, C, H, W = x.shape
    Ho, Wo = H // 2, W // 2
    if H != 2 * Ho:                       # odd height: floor -> drop last row
        x = x[:, :, :2 * Ho, :]
    N = B * C
    xr = x.reshape(N, Ho, 2 * W)          # free reshape: merges each row pair

    # Tile picking: largest blocks under ~2 MiB, sublane dim a multiple of 8.
    row_bytes = 2 * W * x.dtype.itemsize
    budget = 2 * 1024 * 1024
    if Ho * row_bytes <= budget or Ho <= 8:
        th = Ho
    else:
        th = max(8, (budget // row_bytes) // 8 * 8)
    tn = max(1, min(N, budget // max(th * row_bytes, 1)))

    y = pl.pallas_call(
        functools.partial(_avgpool_kernel, width=W),
        out_shape=jax.ShapeDtypeStruct((N, Ho, W), x.dtype),
        grid_spec=pltpu.PrefetchScalarGridSpec(
            num_scalar_prefetch=0,
            grid=(pl.cdiv(N, tn), pl.cdiv(Ho, th)),
            in_specs=[pl.BlockSpec((tn, th, 2 * W), lambda n, h: (n, h, 0))],
            out_specs=pl.BlockSpec((tn, th, W), lambda n, h: (n, h, 0)),
        ),
        compiler_params=pltpu.CompilerParams(
            dimension_semantics=("parallel", "parallel"),
            vmem_limit_bytes=32 * 1024 * 1024),
    )(xr)

    # Compact the even output lanes (XLA strided slice) and restore NCHW.
    return y[:, :, 0:2 * Wo:2].reshape(B, C, Ho, Wo)


def downsample(x, params, with_conv):
    if with_conv:
        return downsample_with_conv(x, params["w"], params["b"])
    return downsample_avgpool(x)


# ------------------------------ references ----------------------------------

def reference_downsample_conv(x, w, b):
    y = jax.lax.conv_general_dilated(
        x, w, window_strides=(2, 2), padding=((0, 1), (0, 1)),
        dimension_numbers=("NCHW", "OIHW", "NCHW"),
        precision=jax.lax.Precision.HIGHEST)
    return y + b[None, :, None, None]


def reference_downsample_pool(x):
    B, C, H, W = x.shape
    Ho, Wo = H // 2, W // 2
    xt = x[:, :, :2 * Ho, :2 * Wo]
    return xt.reshape(B, C, Ho, 2, Wo, 2).mean(axis=(3, 5))


# --------------------------------- main --------------------------------------

if __name__ == "__main__":
    key = jax.random.PRNGKey(0)
    kx, kw, kb = jax.random.split(key, 3)

    B, C, H, W = 2, 4, 16, 16
    x = jax.random.normal(kx, (B, C, H, W), jnp.float32)

    # torch Conv2d default init: U(-s, s), s = 1/sqrt(fan_in)
    s = 1.0 / math.sqrt(C * 3 * 3)
    w = jax.random.uniform(kw, (C, C, 3, 3), jnp.float32, minval=-s, maxval=s)
    b = jax.random.uniform(kb, (C,), jnp.float32, minval=-s, maxval=s)
    params = {"w": w, "b": b}

    # with_conv = True (pad (0,1,0,1) + 3x3 stride-2 conv)
    out = downsample(x, params, with_conv=True)
    out = jax.block_until_ready(out)
    assert out.shape == (B, C, H // 2, W // 2), out.shape
    assert bool(jnp.all(jnp.isfinite(out)))
    ref = reference_downsample_conv(x, w, b)
    conv_err = float(jnp.max(jnp.abs(out - ref)))
    # bf16 operands / f32 accumulation (documented precision choice).
    assert conv_err < 5e-2, f"conv max abs err {conv_err}"

    # with_conv = False (2x2 average pool) — pure f32, essentially exact.
    out_pool = downsample(x, None, with_conv=False)
    out_pool = jax.block_until_ready(out_pool)
    assert out_pool.shape == (B, C, H // 2, W // 2), out_pool.shape
    pool_err = float(jnp.max(jnp.abs(out_pool - reference_downsample_pool(x))))
    assert pool_err < 1e-5, f"pool max abs err {pool_err}"

    print("KERNEL_OK")
</pallas_src>

<mosaic_0001>
module attributes {stable_mosaic.version = 11 : i64} {
  func.func @_conv_kernel(%arg0: i32, %arg1: i32, %arg2: memref<1x9x16x4xbf16, #tpu.memory_space<vmem>>, %arg3: memref<16x1xf32, #tpu.memory_space<vmem>>, %arg4: memref<1x4x4x256xbf16, #tpu.memory_space<vmem>>, %arg5: memref<1x16x128xf32, #tpu.memory_space<vmem>>) attributes {dimension_semantics = [#tpu.dimension_semantics<parallel>, #tpu.dimension_semantics<arbitrary>], iteration_bounds = array<i64: 2, 1>, scalar_prefetch = 0 : i64, scratch_operands = 0 : i64, tpu.core_type = #tpu.core_type<tc>, window_params = [{transform_indices = @transform_0, window_bounds = array<i64: 1, 9, 16, 4>}, {pipeline_mode = #tpu.pipeline_mode<synchronous>, transform_indices = @transform_1, window_bounds = array<i64: 16, 1>}, {transform_indices = @transform_2, window_bounds = array<i64: 1, 4, 4, 256>}, {transform_indices = @transform_3, window_bounds = array<i64: 1, 16, 128>}]} {
    %c0_i32 = arith.constant 0 : i32
    %0 = arith.cmpi eq, %arg1, %c0_i32 : i32
    %1 = arith.extui %0 : i1 to i32
    %c0_i32_0 = arith.constant 0 : i32
    %2 = arith.cmpi ne, %1, %c0_i32_0 : i32
    scf.if %2 {
      %c0_124 = arith.constant 0 : index
      %c0_125 = arith.constant 0 : index
      %102 = vector.load %arg3[%c0_124, %c0_125] : memref<16x1xf32, #tpu.memory_space<vmem>>, vector<16x1xf32>
      %103 = vector.shape_cast %102 : vector<16x1xf32> to vector<16x1xf32>
      %104 = vector.broadcast %103 : vector<16x1xf32> to vector<16x128xf32>
      %c0_126 = arith.constant 0 : index
      %c0_127 = arith.constant 0 : index
      %c0_128 = arith.constant 0 : index
      %105 = vector.load %arg5[%c0_126, %c0_127, %c0_128] : memref<1x16x128xf32, #tpu.memory_space<vmem>>, vector<1x16x128xf32>
      %106 = vector.shape_cast %105 : vector<1x16x128xf32> to vector<16x128xf32>
      %107 = vector.shape_cast %104 : vector<16x128xf32> to vector<1x16x128xf32>
      tpu.vector_store %arg5[%c0_126, %c0_127, %c0_128], %107 {strides = array<i32>} : memref<1x16x128xf32, #tpu.memory_space<vmem>>, vector<1x16x128xf32>,
    } else {
    }
    %c0 = arith.constant 0 : index
    %c0_1 = arith.constant 0 : index
    %c0_2 = arith.constant 0 : index
    %3 = vector.load %arg5[%c0, %c0_1, %c0_2] : memref<1x16x128xf32, #tpu.memory_space<vmem>>, vector<1x16x128xf32>
    %4 = vector.shape_cast %3 : vector<1x16x128xf32> to vector<16x128xf32>
    %c0_3 = arith.constant 0 : index
    %c0_4 = arith.constant 0 : index
    %c0_5 = arith.constant 0 : index
    %c0_6 = arith.constant 0 : index
    %5 = vector.load %arg2[%c0_3, %c0_4, %c0_5, %c0_6] : memref<1x9x16x4xbf16, #tpu.memory_space<vmem>>, vector<1x1x16x4xbf16>
    %6 = vector.shape_cast %5 : vector<1x1x16x4xbf16> to vector<16x4xbf16>
    %c0_7 = arith.constant 0 : index
    %c0_8 = arith.constant 0 : index
    %c0_9 = arith.constant 0 : index
    %c0_10 = arith.constant 0 : index
    %7 = vector.load %arg4[%c0_7, %c0_8, %c0_9, %c0_10] : memref<1x4x4x256xbf16, #tpu.memory_space<vmem>>, vector<1x1x4x128xbf16>
    %8 = vector.shape_cast %7 : vector<1x1x4x128xbf16> to vector<4x128xbf16>
    %cst = arith.constant dense<0.000000e+00> : vector<16x128xf32>
    %9 = tpu.matmul %6, %8, %cst {dimension_numbers = #tpu.dot_dimension_numbers<[1], [0], [0], [1], [0, 0, 1, 1], [], []>} : vector<16x4xbf16>, vector<4x128xbf16>, vector<16x128xf32> -> vector<16x128xf32>
    %10 = arith.addf %4, %9 : vector<16x128xf32>
    %c0_11 = arith.constant 0 : index
    %c0_12 = arith.constant 0 : index
    %c0_13 = arith.constant 0 : index
    %11 = vector.load %arg5[%c0_11, %c0_12, %c0_13] : memref<1x16x128xf32, #tpu.memory_space<vmem>>, vector<1x16x128xf32>
    %12 = vector.shape_cast %11 : vector<1x16x128xf32> to vector<16x128xf32>
    %13 = vector.shape_cast %10 : vector<16x128xf32> to vector<1x16x128xf32>
    tpu.vector_store %arg5[%c0_11, %c0_12, %c0_13], %13 {strides = array<i32>} : memref<1x16x128xf32, #tpu.memory_space<vmem>>, vector<1x16x128xf32>,
    %c0_14 = arith.constant 0 : index
    %c0_15 = arith.constant 0 : index
    %c0_16 = arith.constant 0 : index
    %14 = vector.load %arg5[%c0_14, %c0_15, %c0_16] : memref<1x16x128xf32, #tpu.memory_space<vmem>>, vector<1x16x128xf32>
    %15 = vector.shape_cast %14 : vector<1x16x128xf32> to vector<16x128xf32>
    %c0_17 = arith.constant 0 : index
    %c1 = arith.constant 1 : index
    %c0_18 = arith.constant 0 : index
    %c0_19 = arith.constant 0 : index
    %16 = vector.load %arg2[%c0_17, %c1, %c0_18, %c0_19] : memref<1x9x16x4xbf16, #tpu.memory_space<vmem>>, vector<1x1x16x4xbf16>
    %17 = vector.shape_cast %16 : vector<1x1x16x4xbf16> to vector<16x4xbf16>
    %c0_20 = arith.constant 0 : index
    %c1_21 = arith.constant 1 : index
    %c0_22 = arith.constant 0 : index
    %c0_23 = arith.constant 0 : index
    %18 = vector.load %arg4[%c0_20, %c1_21, %c0_22, %c0_23] : memref<1x4x4x256xbf16, #tpu.memory_space<vmem>>, vector<1x1x4x128xbf16>
    %19 = vector.shape_cast %18 : vector<1x1x4x128xbf16> to vector<4x128xbf16>
    %cst_24 = arith.constant dense<0.000000e+00> : vector<16x128xf32>
    %20 = tpu.matmul %17, %19, %cst_24 {dimension_numbers = #tpu.dot_dimension_numbers<[1], [0], [0], [1], [0, 0, 1, 1], [], []>} : vector<16x4xbf16>, vector<4x128xbf16>, vector<16x128xf32> -> vector<16x128xf32>
    %21 = arith.addf %15, %20 : vector<16x128xf32>
    %c0_25 = arith.constant 0 : index
    %c0_26 = arith.constant 0 : index
    %c0_27 = arith.constant 0 : index
    %22 = vector.load %arg5[%c0_25, %c0_26, %c0_27] : memref<1x16x128xf32, #tpu.memory_space<vmem>>, vector<1x16x128xf32>
    %23 = vector.shape_cast %22 : vector<1x16x128xf32> to vector<16x128xf32>
    %24 = vector.shape_cast %21 : vector<16x128xf32> to vector<1x16x128xf32>
    tpu.vector_store %arg5[%c0_25, %c0_26, %c0_27], %24 {strides = array<i32>} : memref<1x16x128xf32, #tpu.memory_space<vmem>>, vector<1x16x128xf32>,
    %c0_28 = arith.constant 0 : index
    %c0_29 = arith.constant 0 : index
    %c0_30 = arith.constant 0 : index
    %25 = vector.load %arg5[%c0_28, %c0_29, %c0_30] : memref<1x16x128xf32, #tpu.memory_space<vmem>>, vector<1x16x128xf32>
    %26 = vector.shape_cast %25 : vector<1x16x128xf32> to vector<16x128xf32>
    %c0_31 = arith.constant 0 : index
    %c2 = arith.constant 2 : index
    %c0_32 = arith.constant 0 : index
    %c0_33 = arith.constant 0 : index
    %27 = vector.load %arg2[%c0_31, %c2, %c0_32, %c0_33] : memref<1x9x16x4xbf16, #tpu.memory_space<vmem>>, vector<1x1x16x4xbf16>
    %28 = vector.shape_cast %27 : vector<1x1x16x4xbf16> to vector<16x4xbf16>
    %c0_34 = arith.constant 0 : index
    %c0_35 = arith.constant 0 : index
    %c0_36 = arith.constant 0 : index
    %c1_37 = arith.constant 1 : index
    %29 = vector.load %arg4[%c0_34, %c0_35, %c0_36, %c1_37] : memref<1x4x4x256xbf16, #tpu.memory_space<vmem>>, vector<1x1x4x128xbf16>
    %30 = vector.shape_cast %29 : vector<1x1x4x128xbf16> to vector<4x128xbf16>
    %cst_38 = arith.constant dense<0.000000e+00> : vector<16x128xf32>
    %31 = tpu.matmul %28, %30, %cst_38 {dimension_numbers = #tpu.dot_dimension_numbers<[1], [0], [0], [1], [0, 0, 1, 1], [], []>} : vector<16x4xbf16>, vector<4x128xbf16>, vector<16x128xf32> -> vector<16x128xf32>
    %32 = arith.addf %26, %31 : vector<16x128xf32>
    %c0_39 = arith.constant 0 : index
    %c0_40 = arith.constant 0 : index
    %c0_41 = arith.constant 0 : index
    %33 = vector.load %arg5[%c0_39, %c0_40, %c0_41] : memref<1x16x128xf32, #tpu.memory_space<vmem>>, vector<1x16x128xf32>
    %34 = vector.shape_cast %33 : vector<1x16x128xf32> to vector<16x128xf32>
    %35 = vector.shape_cast %32 : vector<16x128xf32> to vector<1x16x128xf32>
    tpu.vector_store %arg5[%c0_39, %c0_40, %c0_41], %35 {strides = array<i32>} : memref<1x16x128xf32, #tpu.memory_space<vmem>>, vector<1x16x128xf32>,
    %c0_42 = arith.constant 0 : index
    %c0_43 = arith.constant 0 : index
    %c0_44 = arith.constant 0 : index
    %36 = vector.load %arg5[%c0_42, %c0_43, %c0_44] : memref<1x16x128xf32, #tpu.memory_space<vmem>>, vector<1x16x128xf32>
    %37 = vector.shape_cast %36 : vector<1x16x128xf32> to vector<16x128xf32>
    %c0_45 = arith.constant 0 : index
    %c3 = arith.constant 3 : index
    %c0_46 = arith.constant 0 : index
    %c0_47 = arith.constant 0 : index
    %38 = vector.load %arg2[%c0_45, %c3, %c0_46, %c0_47] : memref<1x9x16x4xbf16, #tpu.memory_space<vmem>>, vector<1x1x16x4xbf16>
    %39 = vector.shape_cast %38 : vector<1x1x16x4xbf16> to vector<16x4xbf16>
    %c0_48 = arith.constant 0 : index
    %c2_49 = arith.constant 2 : index
    %c0_50 = arith.constant 0 : index
    %c0_51 = arith.constant 0 : index
    %40 = vector.load %arg4[%c0_48, %c2_49, %c0_50, %c0_51] : memref<1x4x4x256xbf16, #tpu.memory_space<vmem>>, vector<1x1x4x128xbf16>
    %41 = vector.shape_cast %40 : vector<1x1x4x128xbf16> to vector<4x128xbf16>
    %cst_52 = arith.constant dense<0.000000e+00> : vector<16x128xf32>
    %42 = tpu.matmul %39, %41, %cst_52 {dimension_numbers = #tpu.dot_dimension_numbers<[1], [0], [0], [1], [0, 0, 1, 1], [], []>} : vector<16x4xbf16>, vector<4x128xbf16>, vector<16x128xf32> -> vector<16x128xf32>
    %43 = arith.addf %37, %42 : vector<16x128xf32>
    %c0_53 = arith.constant 0 : index
    %c0_54 = arith.constant 0 : index
    %c0_55 = arith.constant 0 : index
    %44 = vector.load %arg5[%c0_53, %c0_54, %c0_55] : memref<1x16x128xf32, #tpu.memory_space<vmem>>, vector<1x16x128xf32>
    %45 = vector.shape_cast %44 : vector<1x16x128xf32> to vector<16x128xf32>
    %46 = vector.shape_cast %43 : vector<16x128xf32> to vector<1x16x128xf32>
    tpu.vector_store %arg5[%c0_53, %c0_54, %c0_55], %46 {strides = array<i32>} : memref<1x16x128xf32, #tpu.memory_space<vmem>>, vector<1x16x128xf32>,
    %c0_56 = arith.constant 0 : index
    %c0_57 = arith.constant 0 : index
    %c0_58 = arith.constant 0 : index
    %47 = vector.load %arg5[%c0_56, %c0_57, %c0_58] : memref<1x16x128xf32, #tpu.memory_space<vmem>>, vector<1x16x128xf32>
    %48 = vector.shape_cast %47 : vector<1x16x128xf32> to vector<16x128xf32>
    %c0_59 = arith.constant 0 : index
    %c4 = arith.constant 4 : index
    %c0_60 = arith.constant 0 : index
    %c0_61 = arith.constant 0 : index
    %49 = vector.load %arg2[%c0_59, %c4, %c0_60, %c0_61] : memref<1x9x16x4xbf16, #tpu.memory_space<vmem>>, vector<1x1x16x4xbf16>
    %50 = vector.shape_cast %49 : vector<1x1x16x4xbf16> to vector<16x4xbf16>
    %c0_62 = arith.constant 0 : index
    %c3_63 = arith.constant 3 : index
    %c0_64 = arith.constant 0 : index
    %c0_65 = arith.constant 0 : index
    %51 = vector.load %arg4[%c0_62, %c3_63, %c0_64, %c0_65] : memref<1x4x4x256xbf16, #tpu.memory_space<vmem>>, vector<1x1x4x128xbf16>
    %52 = vector.shape_cast %51 : vector<1x1x4x128xbf16> to vector<4x128xbf16>
    %cst_66 = arith.constant dense<0.000000e+00> : vector<16x128xf32>
    %53 = tpu.matmul %50, %52, %cst_66 {dimension_numbers = #tpu.dot_dimension_numbers<[1], [0], [0], [1], [0, 0, 1, 1], [], []>} : vector<16x4xbf16>, vector<4x128xbf16>, vector<16x128xf32> -> vector<16x128xf32>
    %54 = arith.addf %48, %53 : vector<16x128xf32>
    %c0_67 = arith.constant 0 : index
    %c0_68 = arith.constant 0 : index
    %c0_69 = arith.constant 0 : index
    %55 = vector.load %arg5[%c0_67, %c0_68, %c0_69] : memref<1x16x128xf32, #tpu.memory_space<vmem>>, vector<1x16x128xf32>
    %56 = vector.shape_cast %55 : vector<1x16x128xf32> to vector<16x128xf32>
    %57 = vector.shape_cast %54 : vector<16x128xf32> to vector<1x16x128xf32>
    tpu.vector_store %arg5[%c0_67, %c0_68, %c0_69], %57 {strides = array<i32>} : memref<1x16x128xf32, #tpu.memory_space<vmem>>, vector<1x16x128xf32>,
    %c0_70 = arith.constant 0 : index
    %c0_71 = arith.constant 0 : index
    %c0_72 = arith.constant 0 : index
    %58 = vector.load %arg5[%c0_70, %c0_71, %c0_72] : memref<1x16x128xf32, #tpu.memory_space<vmem>>, vector<1x16x128xf32>
    %59 = vector.shape_cast %58 : vector<1x16x128xf32> to vector<16x128xf32>
    %c0_73 = arith.constant 0 : index
    %c5 = arith.constant 5 : index
    %c0_74 = arith.constant 0 : index
    %c0_75 = arith.constant 0 : index
    %60 = vector.load %arg2[%c0_73, %c5, %c0_74, %c0_75] : memref<1x9x16x4xbf16, #tpu.memory_space<vmem>>, vector<1x1x16x4xbf16>
    %61 = vector.shape_cast %60 : vector<1x1x16x4xbf16> to vector<16x4xbf16>
    %c0_76 = arith.constant 0 : index
    %c2_77 = arith.constant 2 : index
    %c0_78 = arith.constant 0 : index
    %c1_79 = arith.constant 1 : index
    %62 = vector.load %arg4[%c0_76, %c2_77, %c0_78, %c1_79] : memref<1x4x4x256xbf16, #tpu.memory_space<vmem>>, vector<1x1x4x128xbf16>
    %63 = vector.shape_cast %62 : vector<1x1x4x128xbf16> to vector<4x128xbf16>
    %cst_80 = arith.constant dense<0.000000e+00> : vector<16x128xf32>
    %64 = tpu.matmul %61, %63, %cst_80 {dimension_numbers = #tpu.dot_dimension_numbers<[1], [0], [0], [1], [0, 0, 1, 1], [], []>} : vector<16x4xbf16>, vector<4x128xbf16>, vector<16x128xf32> -> vector<16x128xf32>
    %65 = arith.addf %59, %64 : vector<16x128xf32>
    %c0_81 = arith.constant 0 : index
    %c0_82 = arith.constant 0 : index
    %c0_83 = arith.constant 0 : index
    %66 = vector.load %arg5[%c0_81, %c0_82, %c0_83] : memref<1x16x128xf32, #tpu.memory_space<vmem>>, vector<1x16x128xf32>
    %67 = vector.shape_cast %66 : vector<1x16x128xf32> to vector<16x128xf32>
    %68 = vector.shape_cast %65 : vector<16x128xf32> to vector<1x16x128xf32>
    tpu.vector_store %arg5[%c0_81, %c0_82, %c0_83], %68 {strides = array<i32>} : memref<1x16x128xf32, #tpu.memory_space<vmem>>, vector<1x16x128xf32>,
    %c0_84 = arith.constant 0 : index
    %c0_85 = arith.constant 0 : index
    %c0_86 = arith.constant 0 : index
    %69 = vector.load %arg5[%c0_84, %c0_85, %c0_86] : memref<1x16x128xf32, #tpu.memory_space<vmem>>, vector<1x16x128xf32>
    %70 = vector.shape_cast %69 : vector<1x16x128xf32> to vector<16x128xf32>
    %c0_87 = arith.constant 0 : index
    %c6 = arith.constant 6 : index
    %c0_88 = arith.constant 0 : index
    %c0_89 = arith.constant 0 : index
    %71 = vector.load %arg2[%c0_87, %c6, %c0_88, %c0_89] : memref<1x9x16x4xbf16, #tpu.memory_space<vmem>>, vector<1x1x16x4xbf16>
    %72 = vector.shape_cast %71 : vector<1x1x16x4xbf16> to vector<16x4xbf16>
    %c0_90 = arith.constant 0 : index
    %c0_91 = arith.constant 0 : index
    %c0_92 = arith.constant 0 : index
    %c9 = arith.constant 9 : index
    %73 = vector.load %arg4[%c0_90, %c0_91, %c0_92, %c9] : memref<1x4x4x256xbf16, #tpu.memory_space<vmem>>, vector<1x1x4x128xbf16>
    %74 = vector.shape_cast %73 : vector<1x1x4x128xbf16> to vector<4x128xbf16>
    %cst_93 = arith.constant dense<0.000000e+00> : vector<16x128xf32>
    %75 = tpu.matmul %72, %74, %cst_93 {dimension_numbers = #tpu.dot_dimension_numbers<[1], [0], [0], [1], [0, 0, 1, 1], [], []>} : vector<16x4xbf16>, vector<4x128xbf16>, vector<16x128xf32> -> vector<16x128xf32>
    %76 = arith.addf %70, %75 : vector<16x128xf32>
    %c0_94 = arith.constant 0 : index
    %c0_95 = arith.constant 0 : index
    %c0_96 = arith.constant 0 : index
    %77 = vector.load %arg5[%c0_94, %c0_95, %c0_96] : memref<1x16x128xf32, #tpu.memory_space<vmem>>, vector<1x16x128xf32>
    %78 = vector.shape_cast %77 : vector<1x16x128xf32> to vector<16x128xf32>
    %79 = vector.shape_cast %76 : vector<16x128xf32> to vector<1x16x128xf32>
    tpu.vector_store %arg5[%c0_94, %c0_95, %c0_96], %79 {strides = array<i32>} : memref<1x16x128xf32, #tpu.memory_space<vmem>>, vector<1x16x128xf32>,
    %c0_97 = arith.constant 0 : index
    %c0_98 = arith.constant 0 : index
    %c0_99 = arith.constant 0 : index
    %80 = vector.load %arg5[%c0_97, %c0_98, %c0_99] : memref<1x16x128xf32, #tpu.memory_space<vmem>>, vector<1x16x128xf32>
    %81 = vector.shape_cast %80 : vector<1x16x128xf32> to vector<16x128xf32>
    %c0_100 = arith.constant 0 : index
    %c7 = arith.constant 7 : index
    %c0_101 = arith.constant 0 : index
    %c0_102 = arith.constant 0 : index
    %82 = vector.load %arg2[%c0_100, %c7, %c0_101, %c0_102] : memref<1x9x16x4xbf16, #tpu.memory_space<vmem>>, vector<1x1x16x4xbf16>
    %83 = vector.shape_cast %82 : vector<1x1x16x4xbf16> to vector<16x4xbf16>
    %c0_103 = arith.constant 0 : index
    %c1_104 = arith.constant 1 : index
    %c0_105 = arith.constant 0 : index
    %c9_106 = arith.constant 9 : index
    %84 = vector.load %arg4[%c0_103, %c1_104, %c0_105, %c9_106] : memref<1x4x4x256xbf16, #tpu.memory_space<vmem>>, vector<1x1x4x128xbf16>
    %85 = vector.shape_cast %84 : vector<1x1x4x128xbf16> to vector<4x128xbf16>
    %cst_107 = arith.constant dense<0.000000e+00> : vector<16x128xf32>
    %86 = tpu.matmul %83, %85, %cst_107 {dimension_numbers = #tpu.dot_dimension_numbers<[1], [0], [0], [1], [0, 0, 1, 1], [], []>} : vector<16x4xbf16>, vector<4x128xbf16>, vector<16x128xf32> -> vector<16x128xf32>
    %87 = arith.addf %81, %86 : vector<16x128xf32>
    %c0_108 = arith.constant 0 : index
    %c0_109 = arith.constant 0 : index
    %c0_110 = arith.constant 0 : index
    %88 = vector.load %arg5[%c0_108, %c0_109, %c0_110] : memref<1x16x128xf32, #tpu.memory_space<vmem>>, vector<1x16x128xf32>
    %89 = vector.shape_cast %88 : vector<1x16x128xf32> to vector<16x128xf32>
    %90 = vector.shape_cast %87 : vector<16x128xf32> to vector<1x16x128xf32>
    tpu.vector_store %arg5[%c0_108, %c0_109, %c0_110], %90 {strides = array<i32>} : memref<1x16x128xf32, #tpu.memory_space<vmem>>, vector<1x16x128xf32>,
    %c0_111 = arith.constant 0 : index
    %c0_112 = arith.constant 0 : index
    %c0_113 = arith.constant 0 : index
    %91 = vector.load %arg5[%c0_111, %c0_112, %c0_113] : memref<1x16x128xf32, #tpu.memory_space<vmem>>, vector<1x16x128xf32>
    %92 = vector.shape_cast %91 : vector<1x16x128xf32> to vector<16x128xf32>
    %c0_114 = arith.constant 0 : index
    %c8 = arith.constant 8 : index
    %c0_115 = arith.constant 0 : index
    %c0_116 = arith.constant 0 : index
    %93 = vector.load %arg2[%c0_114, %c8, %c0_115, %c0_116] : memref<1x9x16x4xbf16, #tpu.memory_space<vmem>>, vector<1x1x16x4xbf16>
    %94 = vector.shape_cast %93 : vector<1x1x16x4xbf16> to vector<16x4xbf16>
    %c0_117 = arith.constant 0 : index
    %c0_118 = arith.constant 0 : index
    %c0_119 = arith.constant 0 : index
    %c10 = arith.constant 10 : index
    %95 = vector.load %arg4[%c0_117, %c0_118, %c0_119, %c10] : memref<1x4x4x256xbf16, #tpu.memory_space<vmem>>, vector<1x1x4x128xbf16>
    %96 = vector.shape_cast %95 : vector<1x1x4x128xbf16> to vector<4x128xbf16>
    %cst_120 = arith.constant dense<0.000000e+00> : vector<16x128xf32>
    %97 = tpu.matmul %94, %96, %cst_120 {dimension_numbers = #tpu.dot_dimension_numbers<[1], [0], [0], [1], [0, 0, 1, 1], [], []>} : vector<16x4xbf16>, vector<4x128xbf16>, vector<16x128xf32> -> vector<16x128xf32>
    %98 = arith.addf %92, %97 : vector<16x128xf32>
    %c0_121 = arith.constant 0 : index
    %c0_122 = arith.constant 0 : index
    %c0_123 = arith.constant 0 : index
    %99 = vector.load %arg5[%c0_121, %c0_122, %c0_123] : memref<1x16x128xf32, #tpu.memory_space<vmem>>, vector<1x16x128xf32>
    %100 = vector.shape_cast %99 : vector<1x16x128xf32> to vector<16x128xf32>
    %101 = vector.shape_cast %98 : vector<16x128xf32> to vector<1x16x128xf32>
    tpu.vector_store %arg5[%c0_121, %c0_122, %c0_123], %101 {strides = array<i32>} : memref<1x16x128xf32, #tpu.memory_space<vmem>>, vector<1x16x128xf32>,
    return
  }
  func.func @transform_0(%arg0: i32, %arg1: i32) -> (i32, i32, i32, i32) {
    %c0_i32 = arith.constant 0 : i32
    %c0_i32_0 = arith.constant 0 : i32
    %c0_i32_1 = arith.constant 0 : i32
    %c0_i32_2 = arith.constant 0 : i32
    return %arg1, %c0_i32, %c0_i32_0, %c0_i32_1 : i32, i32, i32, i32
  }
  func.func @transform_1(%arg0: i32, %arg1: i32) -> (i32, i32) {
    %c0_i32 = arith.constant 0 : i32
    %c0_i32_0 = arith.constant 0 : i32
    %c0_i32_1 = arith.constant 0 : i32
    return %c0_i32, %c0_i32_0 : i32, i32
  }
  func.func @transform_2(%arg0: i32, %arg1: i32) -> (i32, i32, i32, i32) {
    %c0_i32 = arith.constant 0 : i32
    %c0_i32_0 = arith.constant 0 : i32
    %c0_i32_1 = arith.constant 0 : i32
    return %arg0, %c0_i32, %arg1, %c0_i32_0 : i32, i32, i32, i32
  }
  func.func @transform_3(%arg0: i32, %arg1: i32) -> (i32, i32, i32) {
    %c0_i32 = arith.constant 0 : i32
    %c0_i32_0 = arith.constant 0 : i32
    %c0_i32_1 = arith.constant 0 : i32
    return %arg0, %c0_i32, %c0_i32_0 : i32, i32, i32
  }
}

</mosaic_0001>

<llo_original>
// kernel: downsample_with_conv.1
$region0: #{downsample_with_conv.1}
  #allocation0 [shape = 'u32[]', space=smem, size = 0x4, offset = 0x4, fixed_abs, tag = 'smem constant byte address 0x4 - core index']
  #allocation1 [shape = 'u32[144,128]{1,0:T(1,128)}', space=vmem, size = 0x12000, scoped, tag = 'internal scratch']
  %s0 = inlined_call_operand.vmem [shape: bf16[1,9,16,4], index: 0, kind: input, shape index: {}]
  %s1 = inlined_call_operand.vmem [shape: f32[16,1], index: 1, kind: input, shape index: {}]
  %s2 = inlined_call_operand.vmem [shape: bf16[2,4,4,256], index: 2, kind: input, shape index: {}]
  %s3 = inlined_call_operand.vmem [shape: f32[2,16,128], index: 3, kind: output, shape index: {}]
  %s4 = sld [smem:[#allocation0]]
  $region49: #{downsample_with_conv.1} parent=0
    _
  %s6 = ssub.s32 1, %s4
  %s7 = scalar_select 0, %s6, %s4
  loop: start=0, step=1, limit=4
  $region2: #{downsample_with_conv.1} parent=0 // loop_pre_header
    _
  $region3: #{downsample_with_conv.1} parent=0 // loop_header
    %s9 = sphi 0, %s13
    %p10 = scmp.ge.s32.totalorder %s9, 4
    %s16 = sphi 0, %s28
    %s17 = sphi 0, %s24
    %s18 = sphi 0, %s16
    %s19 = sphi 0, %s17
    %s20 = sphi 0, %s18
    %s21 = sphi 0, %s19
    %s31 = sphi 0, %s33
    %s34 = sphi 0, %s31
    %s35 = sphi 0, %s34
    %s51 = sphi 0, %s35
    %s55 = sphi 0, %s55
    %s57 = sphi 0, %s55
    %s58 = sphi 0, %s57
    %s72 = sphi 0, %s58
    %s80 = sphi 0, %s82
    %s83 = sphi 0, %s80
    %s84 = sphi 0, %s83
    %s100 = sphi 0, %s84
    %s106 = sphi 0, %s108
    %s109 = sphi 0, %s106
    %s110 = sphi 0, %s109
    %s126 = sphi 0, %s110
  $region4: #{downsample_with_conv.1} parent=0 // loop_header_branch
    %12 = sbr.rel (%p10) target = $region8
  $region5: #{downsample_with_conv.1} parent=0 // loop_body
    %s14 = ssub.s32 %s9, 1
    %s15 = ssub.s32 %s9, 2
    %s22 = sadd.s32 1, %s17
    %p23 = scmp.ge.s32.totalorder %s22, 1
    %s24 = scalar_select %p23, 0, %s22
    %s25 = sadd.s32 1, %s16
    %s26 = scalar_select %p23, %s25, %s16
    %p27 = scmp.ge.s32.totalorder %s26, 2
    %s28 = scalar_select %p27, 0, %s26
    %s29 = ssub.s32 %s17, %s24
    %p30 = scmp.eq.s32.totalorder %s29, 0
    %s32 = sadd.s32 %s31, 1
    %s33 = scalar_select %p30, %s31, %s32
    %p36 = pneg %p30
    %p37 = scmp.eq.s32.totalorder %s9, 1
    %p38 = por %p36, %p37
    %p39 = scmp.ne.s32.totalorder %s31, %s34
    %p40 = scmp.eq.s32.totalorder %s9, 0
    %p41 = por %p39, %p40
    %p42 = scmp.ne.s32.totalorder %s31, %s34
    %p43 = scmp.eq.s32.totalorder %s14, 1
    %p44 = por %p42, %p43
    %p45 = scmp.ne.s32.totalorder %s34, %s35
    %p46 = scmp.eq.s32.totalorder %s14, 0
    %p47 = por %p45, %p46
    %p48 = scmp.ne.s32.totalorder %s34, %s35
    %p49 = scmp.eq.s32.totalorder %s15, 1
    %p50 = por %p48, %p49
    %p52 = scmp.ne.s32.totalorder %s35, %s51
    %p53 = scmp.eq.s32.totalorder %s15, 0
    %p54 = por %p52, %p53
    %s56 = sadd.s32 %s55, 1
    %p59 = scmp.eq.s32.totalorder %s9, 1
    %p60 = scmp.ne.s32.totalorder %s55, %s57
    %p61 = scmp.eq.s32.totalorder %s9, 0
    %p62 = por %p60, %p61
    %p63 = scmp.ne.s32.totalorder %s55, %s57
    %p64 = scmp.eq.s32.totalorder %s14, 1
    %p65 = por %p63, %p64
    %p66 = scmp.ne.s32.totalorder %s57, %s58
    %p67 = scmp.eq.s32.totalorder %s14, 0
    %p68 = por %p66, %p67
    %p69 = scmp.ne.s32.totalorder %s57, %s58
    %p70 = scmp.eq.s32.totalorder %s15, 1
    %p71 = por %p69, %p70
    %p73 = scmp.ne.s32.totalorder %s58, %s72
    %p74 = scmp.eq.s32.totalorder %s15, 0
    %p75 = por %p73, %p74
    %s76 = ssub.s32 %s16, %s28
    %s77 = ssub.s32 %s17, %s24
    %s78 = sor.u32 %s76, %s77
    %p79 = scmp.eq.s32.totalorder %s78, 0
    %s81 = sadd.s32 %s80, 1
    %s82 = scalar_select %p79, %s80, %s81
    %p85 = pneg %p79
    %p86 = scmp.eq.s32.totalorder %s9, 1
    %p87 = por %p85, %p86
    %p88 = scmp.ne.s32.totalorder %s80, %s83
    %p89 = scmp.eq.s32.totalorder %s9, 0
    %p90 = por %p88, %p89
    %p91 = scmp.ne.s32.totalorder %s80, %s83
    %p92 = scmp.eq.s32.totalorder %s14, 1
    %p93 = por %p91, %p92
    %p94 = scmp.ne.s32.totalorder %s83, %s84
    %p95 = scmp.eq.s32.totalorder %s14, 0
    %p96 = por %p94, %p95
    %p97 = scmp.ne.s32.totalorder %s83, %s84
    %p98 = scmp.eq.s32.totalorder %s15, 1
    %p99 = por %p97, %p98
    %p101 = scmp.ne.s32.totalorder %s84, %s100
    %p102 = scmp.eq.s32.totalorder %s15, 0
    %p103 = por %p101, %p102
    %s104 = ssub.s32 %s16, %s28
    %p105 = scmp.eq.s32.totalorder %s104, 0
    %s107 = sadd.s32 %s106, 1
    %s108 = scalar_select %p105, %s106, %s107
    %p111 = pneg %p105
    %p112 = scmp.eq.s32.totalorder %s9, 1
    %p113 = por %p111, %p112
    %p114 = scmp.ne.s32.totalorder %s106, %s109
    %p115 = scmp.eq.s32.totalorder %s9, 0
    %p116 = por %p114, %p115
    %p117 = scmp.ne.s32.totalorder %s106, %s109
    %p118 = scmp.eq.s32.totalorder %s14, 1
    %p119 = por %p117, %p118
    %p120 = scmp.ne.s32.totalorder %s109, %s110
    %p121 = scmp.eq.s32.totalorder %s14, 0
    %p122 = por %p120, %p121
    %p123 = scmp.ne.s32.totalorder %s109, %s110
    %p124 = scmp.eq.s32.totalorder %s15, 1
    %p125 = por %p123, %p124
    %p127 = scmp.ne.s32.totalorder %s110, %s126
    %p128 = scmp.eq.s32.totalorder %s15, 0
    %p129 = por %p127, %p128
    %p130 = scmp.le.s32.totalorder 1, %s9
    %p131 = scmp.lt.s32.totalorder %s9, 3
    %p132 = pnand %p130, %p131
    %p133 = pneg %p132
    // Predicated region
    $region9: #{downsample_with_conv.1} parent=5 // pred_check
      _
    $region10: #{downsample_with_conv.1} parent=5 // pred_check_branch
      %135 = sbr.rel (%p132) target = $region12
    $region11: #{downsample_with_conv.1} parent=5 // pred_region
      %s136 = ssub.s32 %s9, 1
      // Predicated region
      $region13: #{downsample_with_conv.1} parent=11 // pred_check
        %p137 = pneg %p47
      $region14: #{downsample_with_conv.1} parent=11 // pred_check_branch
        %139 = sbr.rel (%p137) target = $region16
      $region15: #{downsample_with_conv.1} parent=11 // pred_region
        %p140 = scmp.lt.s32.totalorder %s19, 0
        %s141 = scalar_select %p140, %s19, 0
        %s142 = smul.addr %s141, 18
        %s143 = smul.addr %s142, 4
        %s144 = scalar_lea.vmem %s0, %s143
      $region16: #{downsample_with_conv.1} parent=11 // pred_fallthru
        _
      // Predicated region
      $region17: #{downsample_with_conv.1} parent=11 // pred_check
        %p145 = pneg %p68
      $region18: #{downsample_with_conv.1} parent=11 // pred_check_branch
        %147 = sbr.rel (%p145) target = $region20
      $region19: #{downsample_with_conv.1} parent=11 // pred_region
        _
      $region20: #{downsample_with_conv.1} parent=11 // pred_fallthru
        _
    $region12: #{downsample_with_conv.1} parent=5 // pred_fallthru
      _
    %p148 = scmp.lt.s32.totalorder %s9, 2
    // Predicated region
    $region21: #{downsample_with_conv.1} parent=5 // pred_check
      %p149 = pneg %p148
    $region22: #{downsample_with_conv.1} parent=5 // pred_check_branch
      %151 = sbr.rel (%p149) target = $region24
    $region23: #{downsample_with_conv.1} parent=5 // pred_region
      // Predicated region
      $region25: #{downsample_with_conv.1} parent=23 // pred_check
        %p152 = pneg %p90
      $region26: #{downsample_with_conv.1} parent=23 // pred_check_branch
        %154 = sbr.rel (%p152) target = $region28
      $region27: #{downsample_with_conv.1} parent=23 // pred_region
        %p155 = scmp.lt.s32.totalorder %s16, 1
        %s156 = scalar_select %p155, %s16, 1
        %p157 = scmp.lt.s32.totalorder %s17, 0
        %s158 = scalar_select %p157, %s17, 0
        %s159 = smul.addr %s158, 2
        %s160 = smul.addr %s156, 8
        %s161 = sadd.s32 %s159, %s160
        %s162 = smul.addr %s161, 2
        %s163 = scalar_lea.vmem %s2, %s162
      $region28: #{downsample_with_conv.1} parent=23 // pred_fallthru
        _
    $region24: #{downsample_with_conv.1} parent=5 // pred_fallthru
      _
    %p164 = scmp.le.s32.totalorder 1, %s9
    %p165 = scmp.lt.s32.totalorder %s9, 3
    %p166 = pnand %p164, %p165
    %p167 = pneg %p166
    // Predicated region
    $region29: #{downsample_with_conv.1} parent=5 // pred_check
      _
    $region30: #{downsample_with_conv.1} parent=5 // pred_check_branch
      %169 = sbr.rel (%p166) target = $region32
    $region31: #{downsample_with_conv.1} parent=5 // pred_region
      %s170 = ssub.s32 %s9, 1
      %p171 = scmp.lt.s32.totalorder %s19, 0
      %s172 = scalar_select %p171, %s19, 0
      %s173 = smul.addr %s172, 18
      %s174 = smul.addr %s173, 4
      %s175 = scalar_lea.vmem %s0, %s174
      %p176 = pneg %p47
      %p177 = pneg %p44
      %p178 = pneg %p68
      %p179 = pneg %p65
      %p180 = scmp.lt.s32.totalorder %s18, 1
      %s181 = scalar_select %p180, %s18, 1
      %p182 = scmp.lt.s32.totalorder %s19, 0
      %s183 = scalar_select %p182, %s19, 0
      %s184 = smul.addr %s183, 2
      %s185 = smul.addr %s181, 8
      %s186 = sadd.s32 %s184, %s185
      %s187 = smul.addr %s186, 2
      %s188 = scalar_lea.vmem %s2, %s187
      %p189 = pneg %p96
      %p190 = pneg %p93
      %p191 = pneg %p122
      %p192 = pneg %p119
      %p193 = scmp.lt.s32.totalorder %s18, 1
      %s194 = scalar_select %p193, %s18, 1
      %s195 = smul.addr %s194, 2
      %s196 = smul.addr %s195, 8
      %s197 = scalar_lea.vmem %s3, %s196
      %p198 = scmp.lt.s32.totalorder %s19, 0
      %s199 = scalar_select %p198, %s19, 0
      %s200 = smul.addr %s199, 18
      %s201 = smul.addr %s200, 4
      %s202 = scalar_lea.vmem %s0, %s201
      %p203 = scmp.lt.s32.totalorder %s18, 1
      %s204 = scalar_select %p203, %s18, 1
      %p205 = scmp.lt.s32.totalorder %s19, 0
      %s206 = scalar_select %p205, %s19, 0
      %s207 = smul.addr %s206, 2
      %s208 = smul.addr %s204, 8
      %s209 = sadd.s32 %s207, %s208
      %s210 = smul.addr %s209, 2
      %s211 = scalar_lea.vmem %s2, %s210
      %p212 = scmp.lt.s32.totalorder %s18, 1
      %s213 = scalar_select %p212, %s18, 1
      %s214 = smul.addr %s213, 2
      %s215 = smul.addr %s214, 8
      %s216 = scalar_lea.vmem %s3, %s215
      %p218 = scmp.eq.s32.totalorder %s19, 0
      // Predicated region
      $region33: #{downsample_with_conv.1} parent=31 // pred_check
        %p219 = pneg %p218
      $region34: #{downsample_with_conv.1} parent=31 // pred_check_branch
        %221 = sbr.rel (%p219) target = $region36
      $region35: #{downsample_with_conv.1} parent=31 // pred_region
        %v222 = vld [vmem:[%s1] sm:$0xff]
        %v223 = vld [vmem:[%s1 + $0x8] sm:$0xff]
        %225 = vset.pattern.permute.xlu0 0
        %226 = vperm.xlu0 %225, %v222
        %v227 = vpop.permute.xlu0 %226
        %230 = vset.pattern.permute.xlu0 0
        %231 = vperm.xlu0 %230, %v223
        %v232 = vpop.permute.xlu0 %231
        %234 = vst [vmem:[%s216] sm:$0xff] %v227
        %235 = vst [vmem:[%s216 + $0x8] sm:$0xff] %v232
      $region36: #{downsample_with_conv.1} parent=31 // pred_fallthru
        _
      %v236 = vld [vmem:[%s216] sm:$0xff]
      %v237 = vld [vmem:[%s216 + $0x8] sm:$0xff]
      %v238 = vld [vmem:[%s202] sm:$0xf]
      %v239 = vld [vmem:[%s202 + $0x4] sm:$0xf]
      %v240 = vld [vmem:[%s211] sm:$0x3]
      %v243 = vunpack.c.l.b16 %v238
      %v244 = vunpack.c.l.b16 %v239
      %v245 = vpack.c.b16 %v244, %v243
      %vm246 = vcmask 31744
      %v248 = vsel %vm246, %v245, 0
      %vm250 = vcmask 1041408
      %v252 = vsel %vm250, %v240, 0
      %254 = vmatprep.subr.bf16.mxu0 0
      %255 = vmatpush1.bf16.msra.mxu0 %v252
      %256 = vmatprep.subr.bf16.mxu0 0
      %257 = vmatpush1.bf16.msra.mxu0 0
      %258 = vmatprep.subr.bf16.mxu0 0
      %259 = vmatpush1.bf16.msra.mxu0 0
      %260 = vmatprep.subr.bf16.mxu0 0
      %261 = vmatpush1.bf16.msra.mxu0 0
      %262 = vmatprep.subr.bf16.mxu0 0
      %263 = vmatpush1.bf16.msra.mxu0 0
      %264 = vmatprep.subr.bf16.mxu0 0
      %265 = vmatpush1.bf16.msra.mxu0 0
      %266 = vmatprep.subr.bf16.mxu0 0
      %267 = vmatpush1.bf16.msra.mxu0 0
      %268 = vmatprep.subr.bf16.mxu0 0
      %269 = vmatpush1.bf16.msra.mxu0 0
      %270 = vmatprep.subr.bf16.mxu0 0
      %271 = vmatpush1.bf16.msra.mxu0 0
      %272 = vmatprep.subr.bf16.mxu0 0
      %273 = vmatpush1.bf16.msra.mxu0 0
      %274 = vmatprep.subr.bf16.mxu0 0
      %275 = vmatpush1.bf16.msra.mxu0 0
      %276 = vmatprep.subr.bf16.mxu0 0
      %277 = vmatpush1.bf16.msra.mxu0 0
      %278 = vmatprep.subr.bf16.mxu0 0
      %279 = vmatpush1.bf16.msra.mxu0 0
      %280 = vmatprep.subr.bf16.mxu0 0
      %281 = vmatpush1.bf16.msra.mxu0 0
      %282 = vmatprep.subr.bf16.mxu0 0
      %283 = vmatpush1.bf16.msra.mxu0 0
      %284 = vmatprep.subr.bf16.mxu0 0
      %285 = vmatpush1.bf16.msra.mxu0 0
      %286 = vmatprep.mubr.bf16.mxu0 0
      %287 = vmatmul.mubr.bf16.gmra.mrb[0].mxu0 %v248
      %v288 = vpop.f32.mrb[0].mxu0
      %v289 = vadd.f32 0.0, %v288
      %v290 = vpop.f32.mrb[0].mxu0
      %v291 = vpop.f32.mrb[0].mxu0
      %v292 = vadd.f32 0.0, %v291
      %v293 = vpop.f32.mrb[0].mxu0
      %294 = vdwg.mxu0
      %v295 = vadd.f32 %v236, %v289
      %v296 = vadd.f32 %v237, %v292
      %297 = vst [vmem:[%s216] sm:$0xff] %v295
      %298 = vst [vmem:[%s216 + $0x8] sm:$0xff] %v296
      %v299 = vld [vmem:[%s216] sm:$0xff]
      %v300 = vld [vmem:[%s216 + $0x8] sm:$0xff]
      %s301 = scalar_lea.vmem %s202, 8
      %v302 = vld [vmem:[%s301] sm:$0xf]
      %v303 = vld [vmem:[%s301 + $0x4] sm:$0xf]
      %s304 = scalar_lea.vmem %s211, 4
      %v305 = vld [vmem:[%s304] sm:$0x3]
      %v308 = vunpack.c.l.b16 %v302
      %v309 = vunpack.c.l.b16 %v303
      %v310 = vpack.c.b16 %v309, %v308
      %v312 = vsel %vm246, %v310, 0
      %v315 = vsel %vm250, %v305, 0
      %317 = vmatprep.subr.bf16.mxu0 0
      %318 = vmatpush1.bf16.msra.mxu0 %v315
      %319 = vmatprep.subr.bf16.mxu0 0
      %320 = vmatpush1.bf16.msra.mxu0 0
      %321 = vmatprep.subr.bf16.mxu0 0
      %322 = vmatpush1.bf16.msra.mxu0 0
      %323 = vmatprep.subr.bf16.mxu0 0
      %324 = vmatpush1.bf16.msra.mxu0 0
      %325 = vmatprep.subr.bf16.mxu0 0
      %326 = vmatpush1.bf16.msra.mxu0 0
      %327 = vmatprep.subr.bf16.mxu0 0
      %328 = vmatpush1.bf16.msra.mxu0 0
      %329 = vmatprep.subr.bf16.mxu0 0
      %330 = vmatpush1.bf16.msra.mxu0 0
      %331 = vmatprep.subr.bf16.mxu0 0
      %332 = vmatpush1.bf16.msra.mxu0 0
      %333 = vmatprep.subr.bf16.mxu0 0
      %334 = vmatpush1.bf16.msra.mxu0 0
      %335 = vmatprep.subr.bf16.mxu0 0
      %336 = vmatpush1.bf16.msra.mxu0 0
      %337 = vmatprep.subr.bf16.mxu0 0
      %338 = vmatpush1.bf16.msra.mxu0 0
      %339 = vmatprep.subr.bf16.mxu0 0
      %340 = vmatpush1.bf16.msra.mxu0 0
      %341 = vmatprep.subr.bf16.mxu0 0
      %342 = vmatpush1.bf16.msra.mxu0 0
      %343 = vmatprep.subr.bf16.mxu0 0
      %344 = vmatpush1.bf16.msra.mxu0 0
      %345 = vmatprep.subr.bf16.mxu0 0
      %346 = vmatpush1.bf16.msra.mxu0 0
      %347 = vmatprep.subr.bf16.mxu0 0
      %348 = vmatpush1.bf16.msra.mxu0 0
      %349 = vmatprep.mubr.bf16.mxu0 0
      %350 = vmatmul.mubr.bf16.gmra.mrb[0].mxu0 %v312
      %v351 = vpop.f32.mrb[0].mxu0
      %v352 = vadd.f32 0.0, %v351
      %v353 = vpop.f32.mrb[0].mxu0
      %v354 = vpop.f32.mrb[0].mxu0
      %v355 = vadd.f32 0.0, %v354
      %v356 = vpop.f32.mrb[0].mxu0
      %357 = vdwg.mxu0
      %v358 = vadd.f32 %v299, %v352
      %v359 = vadd.f32 %v300, %v355
      %360 = vst [vmem:[%s216] sm:$0xff] %v358
      %361 = vst [vmem:[%s216 + $0x8] sm:$0xff] %v359
      %v362 = vld [vmem:[%s216] sm:$0xff]
      %v363 = vld [vmem:[%s216 + $0x8] sm:$0xff]
      %s364 = scalar_lea.vmem %s202, 16
      %v365 = vld [vmem:[%s364] sm:$0xf]
      %v366 = vld [vmem:[%s364 + $0x4] sm:$0xf]
      %v367 = vld [vmem:[%s211] sm:$0xf]
      %v370 = vunpack.c.l.b16 %v365
      %v371 = vunpack.c.l.b16 %v366
      %v372 = vpack.c.b16 %v371, %v370
      %v375 = vunpack.c.l.s4 1983009808
      %v376 = vunpack.c.0.s8 %v375
      %v377 = vlaneseq
      %v378 = vshrl.u32 %v377, 7
      %v379 = vsub.s32 %v376, %v378
      %v380 = vrot.slane %v367, %v379
      %v381 = vcombine.high %v380, %v380
      %382 = vrot.lane.b32.xlu0 %v380, 127
      %v383 = vpop.permute.xlu0 %382
      %384 = vrot.lane.b32.xlu0 %v381, 127
      %v385 = vpop.permute.xlu0 %384
      %vm386 = vcmask 1039360
      %v387 = vsel %vm386, %v383, %v385
      %v389 = vsel %vm246, %v372, 0
      %v392 = vsel %vm250, %v387, 0
      %394 = vmatprep.subr.bf16.mxu0 0
      %395 = vmatpush1.bf16.msra.mxu0 %v392
      %396 = vmatprep.subr.bf16.mxu0 0
      %397 = vmatpush1.bf16.msra.mxu0 0
      %398 = vmatprep.subr.bf16.mxu0 0
      %399 = vmatpush1.bf16.msra.mxu0 0
      %400 = vmatprep.subr.bf16.mxu0 0
      %401 = vmatpush1.bf16.msra.mxu0 0
      %402 = vmatprep.subr.bf16.mxu0 0
      %403 = vmatpush1.bf16.msra.mxu0 0
      %404 = vmatprep.subr.bf16.mxu0 0
      %405 = vmatpush1.bf16.msra.mxu0 0
      %406 = vmatprep.subr.bf16.mxu0 0
      %407 = vmatpush1.bf16.msra.mxu0 0
      %408 = vmatprep.subr.bf16.mxu0 0
      %409 = vmatpush1.bf16.msra.mxu0 0
      %410 = vmatprep.subr.bf16.mxu0 0
      %411 = vmatpush1.bf16.msra.mxu0 0
      %412 = vmatprep.subr.bf16.mxu0 0
      %413 = vmatpush1.bf16.msra.mxu0 0
      %414 = vmatprep.subr.bf16.mxu0 0
      %415 = vmatpush1.bf16.msra.mxu0 0
      %416 = vmatprep.subr.bf16.mxu0 0
      %417 = vmatpush1.bf16.msra.mxu0 0
      %418 = vmatprep.subr.bf16.mxu0 0
      %419 = vmatpush1.bf16.msra.mxu0 0
      %420 = vmatprep.subr.bf16.mxu0 0
      %421 = vmatpush1.bf16.msra.mxu0 0
      %422 = vmatprep.subr.bf16.mxu0 0
      %423 = vmatpush1.bf16.msra.mxu0 0
      %424 = vmatprep.subr.bf16.mxu0 0
      %425 = vmatpush1.bf16.msra.mxu0 0
      %426 = vmatprep.mubr.bf16.mxu0 0
      %427 = vmatmul.mubr.bf16.gmra.mrb[0].mxu0 %v389
      %v428 = vpop.f32.mrb[0].mxu0
      %v429 = vadd.f32 0.0, %v428
      %v430 = vpop.f32.mrb[0].mxu0
      %v431 = vpop.f32.mrb[0].mxu0
      %v432 = vadd.f32 0.0, %v431
      %v433 = vpop.f32.mrb[0].mxu0
      %434 = vdwg.mxu0
      %v435 = vadd.f32 %v362, %v429
      %v436 = vadd.f32 %v363, %v432
      %437 = vst [vmem:[%s216] sm:$0xff] %v435
      %438 = vst [vmem:[%s216 + $0x8] sm:$0xff] %v436
      %v439 = vld [vmem:[%s216] sm:$0xff]
      %v440 = vld [vmem:[%s216 + $0x8] sm:$0xff]
      %s441 = scalar_lea.vmem %s202, 24
      %v442 = vld [vmem:[%s441] sm:$0xf]
      %v443 = vld [vmem:[%s441 + $0x4] sm:$0xf]
      %s444 = scalar_lea.vmem %s211, 8
      %v445 = vld [vmem:[%s444] sm:$0x3]
      %v448 = vunpack.c.l.b16 %v442
      %v449 = vunpack.c.l.b16 %v443
      %v450 = vpack.c.b16 %v449, %v448
      %v452 = vsel %vm246, %v450, 0
      %v455 = vsel %vm250, %v445, 0
      %457 = vmatprep.subr.bf16.mxu0 0
      %458 = vmatpush1.bf16.msra.mxu0 %v455
      %459 = vmatprep.subr.bf16.mxu0 0
      %460 = vmatpush1.bf16.msra.mxu0 0
      %461 = vmatprep.subr.bf16.mxu0 0
      %462 = vmatpush1.bf16.msra.mxu0 0
      %463 = vmatprep.subr.bf16.mxu0 0
      %464 = vmatpush1.bf16.msra.mxu0 0
      %465 = vmatprep.subr.bf16.mxu0 0
      %466 = vmatpush1.bf16.msra.mxu0 0
      %467 = vmatprep.subr.bf16.mxu0 0
      %468 = vmatpush1.bf16.msra.mxu0 0
      %469 = vmatprep.subr.bf16.mxu0 0
      %470 = vmatpush1.bf16.msra.mxu0 0
      %471 = vmatprep.subr.bf16.mxu0 0
      %472 = vmatpush1.bf16.msra.mxu0 0
      %473 = vmatprep.subr.bf16.mxu0 0
      %474 = vmatpush1.bf16.msra.mxu0 0
      %475 = vmatprep.subr.bf16.mxu0 0
      %476 = vmatpush1.bf16.msra.mxu0 0
      %477 = vmatprep.subr.bf16.mxu0 0
      %478 = vmatpush1.bf16.msra.mxu0 0
      %479 = vmatprep.subr.bf16.mxu0 0
      %480 = vmatpush1.bf16.msra.mxu0 0
      %481 = vmatprep.subr.bf16.mxu0 0
      %482 = vmatpush1.bf16.msra.mxu0 0
      %483 = vmatprep.subr.bf16.mxu0 0
      %484 = vmatpush1.bf16.msra.mxu0 0
      %485 = vmatprep.subr.bf16.mxu0 0
      %486 = vmatpush1.bf16.msra.mxu0 0
      %487 = vmatprep.subr.bf16.mxu0 0
      %488 = vmatpush1.bf16.msra.mxu0 0
      %489 = vmatprep.mubr.bf16.mxu0 0
      %490 = vmatmul.mubr.bf16.gmra.mrb[0].mxu0 %v452
      %v491 = vpop.f32.mrb[0].mxu0
      %v492 = vadd.f32 0.0, %v491
      %v493 = vpop.f32.mrb[0].mxu0
      %v494 = vpop.f32.mrb[0].mxu0
      %v495 = vadd.f32 0.0, %v494
      %v496 = vpop.f32.mrb[0].mxu0
      %497 = vdwg.mxu0
      %v498 = vadd.f32 %v439, %v492
      %v499 = vadd.f32 %v440, %v495
      %500 = vst [vmem:[%s216] sm:$0xff] %v498
      %501 = vst [vmem:[%s216 + $0x8] sm:$0xff] %v499
      %v502 = vld [vmem:[%s216] sm:$0xff]
      %v503 = vld [vmem:[%s216 + $0x8] sm:$0xff]
      %s504 = scalar_lea.vmem %s202, 32
      %v505 = vld [vmem:[%s504] sm:$0xf]
      %v506 = vld [vmem:[%s504 + $0x4] sm:$0xf]
      %s507 = scalar_lea.vmem %s211, 12
      %v508 = vld [vmem:[%s507] sm:$0x3]
      %v511 = vunpack.c.l.b16 %v505
      %v512 = vunpack.c.l.b16 %v506
      %v513 = vpack.c.b16 %v512, %v511
      %v515 = vsel %vm246, %v513, 0
      %v518 = vsel %vm250, %v508, 0
      %520 = vmatprep.subr.bf16.mxu0 0
      %521 = vmatpush1.bf16.msra.mxu0 %v518
      %522 = vmatprep.subr.bf16.mxu0 0
      %523 = vmatpush1.bf16.msra.mxu0 0
      %524 = vmatprep.subr.bf16.mxu0 0
      %525 = vmatpush1.bf16.msra.mxu0 0
      %526 = vmatprep.subr.bf16.mxu0 0
      %527 = vmatpush1.bf16.msra.mxu0 0
      %528 = vmatprep.subr.bf16.mxu0 0
      %529 = vmatpush1.bf16.msra.mxu0 0
      %530 = vmatprep.subr.bf16.mxu0 0
      %531 = vmatpush1.bf16.msra.mxu0 0
      %532 = vmatprep.subr.bf16.mxu0 0
      %533 = vmatpush1.bf16.msra.mxu0 0
      %534 = vmatprep.subr.bf16.mxu0 0
      %535 = vmatpush1.bf16.msra.mxu0 0
      %536 = vmatprep.subr.bf16.mxu0 0
      %537 = vmatpush1.bf16.msra.mxu0 0
      %538 = vmatprep.subr.bf16.mxu0 0
      %539 = vmatpush1.bf16.msra.mxu0 0
      %540 = vmatprep.subr.bf16.mxu0 0
      %541 = vmatpush1.bf16.msra.mxu0 0
      %542 = vmatprep.subr.bf16.mxu0 0
      %543 = vmatpush1.bf16.msra.mxu0 0
      %544 = vmatprep.subr.bf16.mxu0 0
      %545 = vmatpush1.bf16.msra.mxu0 0
      %546 = vmatprep.subr.bf16.mxu0 0
      %547 = vmatpush1.bf16.msra.mxu0 0
      %548 = vmatprep.subr.bf16.mxu0 0
      %549 = vmatpush1.bf16.msra.mxu0 0
      %550 = vmatprep.subr.bf16.mxu0 0
      %551 = vmatpush1.bf16.msra.mxu0 0
      %552 = vmatprep.mubr.bf16.mxu0 0
      %553 = vmatmul.mubr.bf16.gmra.mrb[0].mxu0 %v515
      %v554 = vpop.f32.mrb[0].mxu0
      %v555 = vadd.f32 0.0, %v554
      %v556 = vpop.f32.mrb[0].mxu0
      %v557 = vpop.f32.mrb[0].mxu0
      %v558 = vadd.f32 0.0, %v557
      %v559 = vpop.f32.mrb[0].mxu0
      %560 = vdwg.mxu0
      %v561 = vadd.f32 %v502, %v555
      %v562 = vadd.f32 %v503, %v558
      %563 = vst [vmem:[%s216] sm:$0xff] %v561
      %564 = vst [vmem:[%s216 + $0x8] sm:$0xff] %v562
      %v565 = vld [vmem:[%s216] sm:$0xff]
      %v566 = vld [vmem:[%s216 + $0x8] sm:$0xff]
      %s567 = scalar_lea.vmem %s202, 40
      %v568 = vld [vmem:[%s567] sm:$0xf]
      %v569 = vld [vmem:[%s567 + $0x4] sm:$0xf]
      %v570 = vld [vmem:[%s444] sm:$0xf]
      %v573 = vunpack.c.l.b16 %v568
      %v574 = vunpack.c.l.b16 %v569
      %v575 = vpack.c.b16 %v574, %v573
      %v578 = vunpack.c.l.s4 1983009808
      %v579 = vunpack.c.0.s8 %v578
      %v580 = vlaneseq
      %v581 = vshrl.u32 %v580, 7
      %v582 = vsub.s32 %v579, %v581
      %v583 = vrot.slane %v570, %v582
      %v584 = vcombine.high %v583, %v583
      %585 = vrot.lane.b32.xlu0 %v583, 127
      %v586 = vpop.permute.xlu0 %585
      %587 = vrot.lane.b32.xlu0 %v584, 127
      %v588 = vpop.permute.xlu0 %587
      %v589 = vsel %vm386, %v586, %v588
      %v591 = vsel %vm246, %v575, 0
      %v594 = vsel %vm250, %v589, 0
      %596 = vmatprep.subr.bf16.mxu0 0
      %597 = vmatpush1.bf16.msra.mxu0 %v594
      %598 = vmatprep.subr.bf16.mxu0 0
      %599 = vmatpush1.bf16.msra.mxu0 0
      %600 = vmatprep.subr.bf16.mxu0 0
      %601 = vmatpush1.bf16.msra.mxu0 0
      %602 = vmatprep.subr.bf16.mxu0 0
      %603 = vmatpush1.bf16.msra.mxu0 0
      %604 = vmatprep.subr.bf16.mxu0 0
      %605 = vmatpush1.bf16.msra.mxu0 0
      %606 = vmatprep.subr.bf16.mxu0 0
      %607 = vmatpush1.bf16.msra.mxu0 0
      %608 = vmatprep.subr.bf16.mxu0 0
      %609 = vmatpush1.bf16.msra.mxu0 0
      %610 = vmatprep.subr.bf16.mxu0 0
      %611 = vmatpush1.bf16.msra.mxu0 0
      %612 = vmatprep.subr.bf16.mxu0 0
      %613 = vmatpush1.bf16.msra.mxu0 0
      %614 = vmatprep.subr.bf16.mxu0 0
      %615 = vmatpush1.bf16.msra.mxu0 0
      %616 = vmatprep.subr.bf16.mxu0 0
      %617 = vmatpush1.bf16.msra.mxu0 0
      %618 = vmatprep.subr.bf16.mxu0 0
      %619 = vmatpush1.bf16.msra.mxu0 0
      %620 = vmatprep.subr.bf16.mxu0 0
      %621 = vmatpush1.bf16.msra.mxu0 0
      %622 = vmatprep.subr.bf16.mxu0 0
      %623 = vmatpush1.bf16.msra.mxu0 0
      %624 = vmatprep.subr.bf16.mxu0 0
      %625 = vmatpush1.bf16.msra.mxu0 0
      %626 = vmatprep.subr.bf16.mxu0 0
      %627 = vmatpush1.bf16.msra.mxu0 0
      %628 = vmatprep.mubr.bf16.mxu0 0
      %629 = vmatmul.mubr.bf16.gmra.mrb[0].mxu0 %v591
      %v630 = vpop.f32.mrb[0].mxu0
      %v631 = vadd.f32 0.0, %v630
      %v632 = vpop.f32.mrb[0].mxu0
      %v633 = vpop.f32.mrb[0].mxu0
      %v634 = vadd.f32 0.0, %v633
      %v635 = vpop.f32.mrb[0].mxu0
      %636 = vdwg.mxu0
      %v637 = vadd.f32 %v565, %v631
      %v638 = vadd.f32 %v566, %v634
      %639 = vst [vmem:[%s216] sm:$0xff] %v637
      %640 = vst [vmem:[%s216 + $0x8] sm:$0xff] %v638
      %v641 = vld [vmem:[%s216] sm:$0xff]
      %v642 = vld [vmem:[%s216 + $0x8] sm:$0xff]
      %s643 = scalar_lea.vmem %s202, 48
      %v644 = vld [vmem:[%s643] sm:$0xf]
      %v645 = vld [vmem:[%s643 + $0x4] sm:$0xf]
      %v646 = vld [vmem:[%s211] sm:$0xf]
      %v649 = vunpack.c.l.b16 %v644
      %v650 = vunpack.c.l.b16 %v645
      %v651 = vpack.c.b16 %v650, %v649
      %v654 = vunpack.c.l.s4 1983009808
      %v655 = vunpack.c.0.s8 %v654
      %v656 = vlaneseq
      %v657 = vshrl.u32 %v656, 7
      %v658 = vsub.s32 %v655, %v657
      %v659 = vrot.slane %v646, %v658
      %v660 = vcombine.high %v659, %v659
      %661 = vrot.lane.b32.xlu0 %v659, 119
      %v662 = vpop.permute.xlu0 %661
      %663 = vrot.lane.b32.xlu0 %v660, 119
      %v664 = vpop.permute.xlu0 %663
      %vm665 = vcmask 973824
      %v666 = vsel %vm665, %v662, %v664
      %v668 = vsel %vm246, %v651, 0
      %v671 = vsel %vm250, %v666, 0
      %673 = vmatprep.subr.bf16.mxu0 0
      %674 = vmatpush1.bf16.msra.mxu0 %v671
      %675 = vmatprep.subr.bf16.mxu0 0
      %676 = vmatpush1.bf16.msra.mxu0 0
      %677 = vmatprep.subr.bf16.mxu0 0
      %678 = vmatpush1.bf16.msra.mxu0 0
      %679 = vmatprep.subr.bf16.mxu0 0
      %680 = vmatpush1.bf16.msra.mxu0 0
      %681 = vmatprep.subr.bf16.mxu0 0
      %682 = vmatpush1.bf16.msra.mxu0 0
      %683 = vmatprep.subr.bf16.mxu0 0
      %684 = vmatpush1.bf16.msra.mxu0 0
      %685 = vmatprep.subr.bf16.mxu0 0
      %686 = vmatpush1.bf16.msra.mxu0 0
      %687 = vmatprep.subr.bf16.mxu0 0
      %688 = vmatpush1.bf16.msra.mxu0 0
      %689 = vmatprep.subr.bf16.mxu0 0
      %690 = vmatpush1.bf16.msra.mxu0 0
      %691 = vmatprep.subr.bf16.mxu0 0
      %692 = vmatpush1.bf16.msra.mxu0 0
      %693 = vmatprep.subr.bf16.mxu0 0
      %694 = vmatpush1.bf16.msra.mxu0 0
      %695 = vmatprep.subr.bf16.mxu0 0
      %696 = vmatpush1.bf16.msra.mxu0 0
      %697 = vmatprep.subr.bf16.mxu0 0
      %698 = vmatpush1.bf16.msra.mxu0 0
      %699 = vmatprep.subr.bf16.mxu0 0
      %700 = vmatpush1.bf16.msra.mxu0 0
      %701 = vmatprep.subr.bf16.mxu0 0
      %702 = vmatpush1.bf16.msra.mxu0 0
      %703 = vmatprep.subr.bf16.mxu0 0
      %704 = vmatpush1.bf16.msra.mxu0 0
      %705 = vmatprep.mubr.bf16.mxu0 0
      %706 = vmatmul.mubr.bf16.gmra.mrb[0].mxu0 %v668
      %v707 = vpop.f32.mrb[0].mxu0
      %v708 = vadd.f32 0.0, %v707
      %v709 = vpop.f32.mrb[0].mxu0
      %v710 = vpop.f32.mrb[0].mxu0
      %v711 = vadd.f32 0.0, %v710
      %v712 = vpop.f32.mrb[0].mxu0
      %713 = vdwg.mxu0
      %v714 = vadd.f32 %v641, %v708
      %v715 = vadd.f32 %v642, %v711
      %716 = vst [vmem:[%s216] sm:$0xff] %v714
      %717 = vst [vmem:[%s216 + $0x8] sm:$0xff] %v715
      %v718 = vld [vmem:[%s216] sm:$0xff]
      %v719 = vld [vmem:[%s216 + $0x8] sm:$0xff]
      %s720 = scalar_lea.vmem %s202, 56
      %v721 = vld [vmem:[%s720] sm:$0xf]
      %v722 = vld [vmem:[%s720 + $0x4] sm:$0xf]
      %v723 = vld [vmem:[%s304] sm:$0xf]
      %v726 = vunpack.c.l.b16 %v721
      %v727 = vunpack.c.l.b16 %v722
      %v728 = vpack.c.b16 %v727, %v726
      %v731 = vunpack.c.l.s4 1983009808
      %v732 = vunpack.c.0.s8 %v731
      %v733 = vlaneseq
      %v734 = vshrl.u32 %v733, 7
      %v735 = vsub.s32 %v732, %v734
      %v736 = vrot.slane %v723, %v735
      %v737 = vcombine.high %v736, %v736
      %738 = vrot.lane.b32.xlu0 %v736, 119
      %v739 = vpop.permute.xlu0 %738
      %740 = vrot.lane.b32.xlu0 %v737, 119
      %v741 = vpop.permute.xlu0 %740
      %v742 = vsel %vm665, %v739, %v741
      %v744 = vsel %vm246, %v728, 0
      %v747 = vsel %vm250, %v742, 0
      %749 = vmatprep.subr.bf16.mxu0 0
      %750 = vmatpush1.bf16.msra.mxu0 %v747
      %751 = vmatprep.subr.bf16.mxu0 0
      %752 = vmatpush1.bf16.msra.mxu0 0
      %753 = vmatprep.subr.bf16.mxu0 0
      %754 = vmatpush1.bf16.msra.mxu0 0
      %755 = vmatprep.subr.bf16.mxu0 0
      %756 = vmatpush1.bf16.msra.mxu0 0
      %757 = vmatprep.subr.bf16.mxu0 0
      %758 = vmatpush1.bf16.msra.mxu0 0
      %759 = vmatprep.subr.bf16.mxu0 0
      %760 = vmatpush1.bf16.msra.mxu0 0
      %761 = vmatprep.subr.bf16.mxu0 0
      %762 = vmatpush1.bf16.msra.mxu0 0
      %763 = vmatprep.subr.bf16.mxu0 0
      %764 = vmatpush1.bf16.msra.mxu0 0
      %765 = vmatprep.subr.bf16.mxu0 0
      %766 = vmatpush1.bf16.msra.mxu0 0
      %767 = vmatprep.subr.bf16.mxu0 0
      %768 = vmatpush1.bf16.msra.mxu0 0
      %769 = vmatprep.subr.bf16.mxu0 0
      %770 = vmatpush1.bf16.msra.mxu0 0
      %771 = vmatprep.subr.bf16.mxu0 0
      %772 = vmatpush1.bf16.msra.mxu0 0
      %773 = vmatprep.subr.bf16.mxu0 0
      %774 = vmatpush1.bf16.msra.mxu0 0
      %775 = vmatprep.subr.bf16.mxu0 0
      %776 = vmatpush1.bf16.msra.mxu0 0
      %777 = vmatprep.subr.bf16.mxu0 0
      %778 = vmatpush1.bf16.msra.mxu0 0
      %779 = vmatprep.subr.bf16.mxu0 0
      %780 = vmatpush1.bf16.msra.mxu0 0
      %781 = vmatprep.mubr.bf16.mxu0 0
      %782 = vmatmul.mubr.bf16.gmra.mrb[0].mxu0 %v744
      %v783 = vpop.f32.mrb[0].mxu0
      %v784 = vadd.f32 0.0, %v783
      %v785 = vpop.f32.mrb[0].mxu0
      %v786 = vpop.f32.mrb[0].mxu0
      %v787 = vadd.f32 0.0, %v786
      %v788 = vpop.f32.mrb[0].mxu0
      %789 = vdwg.mxu0
      %v790 = vadd.f32 %v718, %v784
      %v791 = vadd.f32 %v719, %v787
      %792 = vst [vmem:[%s216] sm:$0xff] %v790
      %793 = vst [vmem:[%s216 + $0x8] sm:$0xff] %v791
      %v794 = vld [vmem:[%s216] sm:$0xff]
      %v795 = vld [vmem:[%s216 + $0x8] sm:$0xff]
      %s796 = scalar_lea.vmem %s202, 64
      %v797 = vld [vmem:[%s796] sm:$0xf]
      %v798 = vld [vmem:[%s796 + $0x4] sm:$0xf]
      %v799 = vld [vmem:[%s211] sm:$0xf]
      %v802 = vunpack.c.l.b16 %v797
      %v803 = vunpack.c.l.b16 %v798
      %v804 = vpack.c.b16 %v803, %v802
      %v807 = vunpack.c.l.s4 1983009808
      %v808 = vunpack.c.0.s8 %v807
      %v809 = vlaneseq
      %v810 = vshrl.u32 %v809, 7
      %v811 = vsub.s32 %v808, %v810
      %v812 = vrot.slane %v799, %v811
      %v813 = vcombine.high %v812, %v812
      %814 = vrot.lane.b32.xlu0 %v812, 118
      %v815 = vpop.permute.xlu0 %814
      %816 = vrot.lane.b32.xlu0 %v813, 118
      %v817 = vpop.permute.xlu0 %816
      %vm818 = vcmask 965632
      %v819 = vsel %vm818, %v815, %v817
      %v821 = vsel %vm246, %v804, 0
      %v824 = vsel %vm250, %v819, 0
      %826 = vmatprep.subr.bf16.mxu0 0
      %827 = vmatpush1.bf16.msra.mxu0 %v824
      %828 = vmatprep.subr.bf16.mxu0 0
      %829 = vmatpush1.bf16.msra.mxu0 0
      %830 = vmatprep.subr.bf16.mxu0 0
      %831 = vmatpush1.bf16.msra.mxu0 0
      %832 = vmatprep.subr.bf16.mxu0 0
      %833 = vmatpush1.bf16.msra.mxu0 0
      %834 = vmatprep.subr.bf16.mxu0 0
      %835 = vmatpush1.bf16.msra.mxu0 0
      %836 = vmatprep.subr.bf16.mxu0 0
      %837 = vmatpush1.bf16.msra.mxu0 0
      %838 = vmatprep.subr.bf16.mxu0 0
      %839 = vmatpush1.bf16.msra.mxu0 0
      %840 = vmatprep.subr.bf16.mxu0 0
      %841 = vmatpush1.bf16.msra.mxu0 0
      %842 = vmatprep.subr.bf16.mxu0 0
      %843 = vmatpush1.bf16.msra.mxu0 0
      %844 = vmatprep.subr.bf16.mxu0 0
      %845 = vmatpush1.bf16.msra.mxu0 0
      %846 = vmatprep.subr.bf16.mxu0 0
      %847 = vmatpush1.bf16.msra.mxu0 0
      %848 = vmatprep.subr.bf16.mxu0 0
      %849 = vmatpush1.bf16.msra.mxu0 0
      %850 = vmatprep.subr.bf16.mxu0 0
      %851 = vmatpush1.bf16.msra.mxu0 0
      %852 = vmatprep.subr.bf16.mxu0 0
      %853 = vmatpush1.bf16.msra.mxu0 0
      %854 = vmatprep.subr.bf16.mxu0 0
      %855 = vmatpush1.bf16.msra.mxu0 0
      %856 = vmatprep.subr.bf16.mxu0 0
      %857 = vmatpush1.bf16.msra.mxu0 0
      %858 = vmatprep.mubr.bf16.mxu0 0
      %859 = vmatmul.mubr.bf16.gmra.mrb[0].mxu0 %v821
      %v860 = vpop.f32.mrb[0].mxu0
      %v861 = vadd.f32 0.0, %v860
      %v862 = vpop.f32.mrb[0].mxu0
      %v863 = vpop.f32.mrb[0].mxu0
      %v864 = vadd.f32 0.0, %v863
      %v865 = vpop.f32.mrb[0].mxu0
      %866 = vdwg.mxu0
      %v867 = vadd.f32 %v794, %v861
      %v868 = vadd.f32 %v795, %v864
      %869 = vst [vmem:[%s216] sm:$0xff] %v867
      %870 = vst [vmem:[%s216 + $0x8] sm:$0xff] %v868
      %p871 = scmp.lt.s32.totalorder %s18, 1
      %s872 = scalar_select %p871, %s18, 1
      %s873 = smul.addr %s872, 2
      %s874 = smul.addr %s873, 8
      %s875 = scalar_lea.vmem %s3, %s874
      // Predicated region
      $region37: #{downsample_with_conv.1} parent=31 // pred_check
        %p876 = pneg %p119
      $region38: #{downsample_with_conv.1} parent=31 // pred_check_branch
        %878 = sbr.rel (%p876) target = $region40
      $region39: #{downsample_with_conv.1} parent=31 // pred_region
        _
      $region40: #{downsample_with_conv.1} parent=31 // pred_fallthru
        _
    $region32: #{downsample_with_conv.1} parent=5 // pred_fallthru
      _
    %p879 = scmp.le.s32.totalorder 2, %s9
    // Predicated region
    $region41: #{downsample_with_conv.1} parent=5 // pred_check
      %p880 = pneg %p879
    $region42: #{downsample_with_conv.1} parent=5 // pred_check_branch
      %882 = sbr.rel (%p880) target = $region44
    $region43: #{downsample_with_conv.1} parent=5 // pred_region
      %s883 = ssub.s32 %s9, 2
      // Predicated region
      $region45: #{downsample_with_conv.1} parent=43 // pred_check
        %p884 = pneg %p125
      $region46: #{downsample_with_conv.1} parent=43 // pred_check_branch
        %886 = sbr.rel (%p884) target = $region48
      $region47: #{downsample_with_conv.1} parent=43 // pred_region
        %p887 = scmp.lt.s32.totalorder %s20, 1
        %s888 = scalar_select %p887, %s20, 1
        %s889 = smul.addr %s888, 2
        %s890 = smul.addr %s889, 8
        %s891 = scalar_lea.vmem %s3, %s890
      $region48: #{downsample_with_conv.1} parent=43 // pred_fallthru
        _
    $region44: #{downsample_with_conv.1} parent=5 // pred_fallthru
      _
  $region6: #{downsample_with_conv.1} parent=0 // loop_footer
    %s13 = sadd.s32 1, %s9
  $region7: #{downsample_with_conv.1} parent=0 // loop_footer_branch
    %8 = sbr.rel target = $region3
  $region8: #{downsample_with_conv.1} parent=0 // loop_exit
    _

</llo_original>
